<compile_context>
chip_gen: v5e
topology: v5e:2x2
jax: 0.10.0
libtpu: 0.0.40
codegen_flags: <defaults>
</compile_context>

<pallas_src>
import functools
import math

import jax
import jax.numpy as jnp
from jax import lax
from jax.experimental import pallas as pl
from jax.experimental.pallas import tpu as pltpu

_DEFAULT_S_TILE = 2048  # lanes per spatial tile (multiple of 128); fits VMEM on v5e/v6e/v7x


def _dice_kernel(pred_ref, tgt_ref, num_ref, den_ref, num_acc, den_acc,
                 *, n_classes, s_tile, s_valid, needs_mask):
    # pred_ref: (1, C, S_TILE) native dtype    tgt_ref: (1, 1, S_TILE) int8
    # num_ref/den_ref: (1, C, 1) f32 (resident across the S axis, written once)
    # num_acc/den_acc: (C, S_TILE) f32 VMEM scratch (lane-wide accumulators)
    s = pl.program_id(1)

    @pl.when(s == 0)
    def _init():
        num_acc[...] = jnp.zeros_like(num_acc)
        den_acc[...] = jnp.zeros_like(den_acc)

    p = pred_ref[0].astype(jnp.float32)           # (C, S_TILE), upcast inside the kernel
    t = tgt_ref[0].astype(jnp.int32)              # (1, S_TILE) class ids

    # numerically stable softmax over the channel (sublane) axis
    m = jnp.max(p, axis=0, keepdims=True)         # (1, S_TILE)
    e = jnp.exp(p - m)                            # (C, S_TILE)  (EUP)
    denom = jnp.sum(e, axis=0, keepdims=True)     # (1, S_TILE)
    sm = e * pl.reciprocal(denom, approx=False)   # 1 reciprocal row + C broadcast muls

    if needs_mask:
        # zero out padded spatial columns (they carry softmax mass otherwise)
        col = lax.broadcasted_iota(jnp.int32, (n_classes, s_tile), 1) + s * s_tile
        sm = jnp.where(col < s_valid, sm, 0.0)

    # one-hot along the channel axis; padded target id == C never matches 0..C-1
    class_ids = lax.broadcasted_iota(jnp.int32, (n_classes, s_tile), 0)
    onehot = (class_ids == t).astype(jnp.float32)

    num_acc[...] += sm * onehot
    den_acc[...] += sm * sm + onehot              # onehot ** 2 == onehot

    @pl.when(s == pl.num_programs(1) - 1)
    def _finalize():
        num_ref[0] = jnp.sum(num_acc[...], axis=1, keepdims=True)
        den_ref[0] = jnp.sum(den_acc[...], axis=1, keepdims=True)


def dice_loss(predict, target, smooth=1.0, ignore_index=None, weight=None):
    """predict: [N, C, *spatial] float; target: [N, *spatial] integer class ids."""
    N, C = predict.shape[0], predict.shape[1]
    S = math.prod(predict.shape[2:])

    s_lane = max(128, ((S + 127) // 128) * 128)       # round up to a lane multiple
    s_tile = min(_DEFAULT_S_TILE, s_lane)
    s_pad = ((S + s_tile - 1) // s_tile) * s_tile
    n_s_tiles = s_pad // s_tile
    needs_mask = s_pad != S

    # Keep predict in its native dtype (no f32 upcast copy in HBM); target as int8.
    pred = predict.reshape(N, C, S)
    tgt_dtype = jnp.int8 if C <= 127 else jnp.int32
    tgt = target.reshape(N, 1, S).astype(tgt_dtype)
    if needs_mask:
        pred = jnp.pad(pred, ((0, 0), (0, 0), (0, s_pad - S)))
        tgt = jnp.pad(tgt, ((0, 0), (0, 0), (0, s_pad - S)),
                      constant_values=jnp.array(C, dtype=tgt_dtype))

    kernel = functools.partial(
        _dice_kernel, n_classes=C, s_tile=s_tile, s_valid=S, needs_mask=needs_mask)

    cost = pl.CostEstimate(
        flops=int(8 * N * C * s_pad),
        transcendentals=int(N * (C + 1) * s_pad),
        bytes_accessed=int(pred.size * pred.dtype.itemsize
                           + tgt.size * tgt.dtype.itemsize + 2 * N * C * 4),
    )

    num, den = pl.pallas_call(
        kernel,
        out_shape=(
            jax.ShapeDtypeStruct((N, C, 1), jnp.float32),
            jax.ShapeDtypeStruct((N, C, 1), jnp.float32),
        ),
        grid=(N, n_s_tiles),
        in_specs=[
            pl.BlockSpec((1, C, s_tile), lambda n, s: (n, 0, s)),
            pl.BlockSpec((1, 1, s_tile), lambda n, s: (n, 0, s)),
        ],
        out_specs=(
            pl.BlockSpec((1, C, 1), lambda n, s: (n, 0, 0)),
            pl.BlockSpec((1, C, 1), lambda n, s: (n, 0, 0)),
        ),
        scratch_shapes=[
            pltpu.VMEM((C, s_tile), jnp.float32),
            pltpu.VMEM((C, s_tile), jnp.float32),
        ],
        compiler_params=pltpu.CompilerParams(
            dimension_semantics=("parallel", "arbitrary")),
        cost_estimate=cost,
    )(pred, tgt)

    num = num[..., 0]  # (N, C)
    den = den[..., 0]  # (N, C)

    # BinaryDiceLoss: loss = 1 - (num + smooth) / (den + smooth), reduction='mean' over batch
    loss_nc = 1.0 - (num + smooth) / (den + smooth)   # (N, C)
    loss_c = jnp.mean(loss_nc, axis=0)                # (C,)

    if ignore_index is not None:
        mask = jnp.arange(C) != ignore_index
        loss_c = jnp.where(mask, loss_c, 0.0)
    if weight is not None:
        # TODO(synk): PyTorch reference has a bug (`self.weights`); faithful default is weight=None.
        loss_c = loss_c * jnp.asarray(weight, dtype=loss_c.dtype)

    return jnp.sum(loss_c) / C


def _dice_loss_ref(predict, target, smooth=1.0):
    """Pure-JAX reference matching the PyTorch DiceLoss forward."""
    N, C = predict.shape[0], predict.shape[1]
    S = math.prod(predict.shape[2:])
    p = jax.nn.softmax(predict.reshape(N, C, S).astype(jnp.float32), axis=1)
    t = jax.nn.one_hot(target.reshape(N, S), C, axis=1, dtype=jnp.float32)
    num = jnp.sum(p * t, axis=2) + smooth
    den = jnp.sum(p ** 2 + t ** 2, axis=2) + smooth
    loss_nc = 1.0 - num / den
    return jnp.sum(jnp.mean(loss_nc, axis=0)) / C


if __name__ == "__main__":
    key = jax.random.PRNGKey(0)
    N, C = 2, 4

    # Case 1: aligned spatial size (f32)
    k1, k2, k3, k4 = jax.random.split(key, 4)
    predict = jax.random.normal(k1, (N, C, 16, 16), dtype=jnp.float32)
    target = jax.random.randint(k2, (N, 16, 16), 0, C, dtype=jnp.int32)
    loss = dice_loss(predict, target)
    jax.block_until_ready(loss)
    ref = _dice_loss_ref(predict, target)
    assert jnp.allclose(loss, ref, atol=1e-5, rtol=1e-5), (loss, ref)

    # Case 2: ragged spatial size (exercises the padding/mask path)
    predict2 = jax.random.normal(k3, (N, C, 9, 11), dtype=jnp.float32)
    target2 = jax.random.randint(k4, (N, 9, 11), 0, C, dtype=jnp.int32)
    loss2 = dice_loss(predict2, target2)
    jax.block_until_ready(loss2)
    ref2 = _dice_loss_ref(predict2, target2)
    assert jnp.allclose(loss2, ref2, atol=1e-5, rtol=1e-5), (loss2, ref2)

    # Case 3: bf16 predict streamed in native dtype (upcast happens in-kernel)
    predict3 = predict.astype(jnp.bfloat16)
    loss3 = dice_loss(predict3, target)
    jax.block_until_ready(loss3)
    ref3 = _dice_loss_ref(predict3, target)
    assert jnp.allclose(loss3, ref3, atol=1e-4, rtol=1e-4), (loss3, ref3)

    print("KERNEL_OK")
</pallas_src>

<mosaic_0001>
module attributes {stable_mosaic.version = 11 : i64} {
  func.func @_dice_kernel(%arg0: i32, %arg1: i32, %arg2: memref<1x4x256xf32, #tpu.memory_space<vmem>>, %arg3: memref<1x1x256xi8, #tpu.memory_space<vmem>>, %arg4: memref<1x4x1xf32, #tpu.memory_space<vmem>>, %arg5: memref<1x4x1xf32, #tpu.memory_space<vmem>>, %arg6: memref<4x256xf32, #tpu.memory_space<vmem>>, %arg7: memref<4x256xf32, #tpu.memory_space<vmem>>) attributes {dimension_semantics = [#tpu.dimension_semantics<parallel>, #tpu.dimension_semantics<arbitrary>], iteration_bounds = array<i64: 2, 1>, scalar_prefetch = 0 : i64, scratch_operands = 2 : i64, tpu.core_type = #tpu.core_type<tc>, window_params = [{transform_indices = @transform_0, window_bounds = array<i64: 1, 4, 256>}, {transform_indices = @transform_1, window_bounds = array<i64: 1, 1, 256>}, {transform_indices = @transform_2, window_bounds = array<i64: 1, 4, 1>}, {transform_indices = @transform_3, window_bounds = array<i64: 1, 4, 1>}]} {
    %c0_i32 = arith.constant 0 : i32
    %0 = arith.cmpi eq, %arg1, %c0_i32 : i32
    %1 = arith.extui %0 : i1 to i32
    %c0_i32_0 = arith.constant 0 : i32
    %2 = arith.cmpi ne, %1, %c0_i32_0 : i32
    scf.if %2 {
      %cst_17 = arith.constant 0.000000e+00 : f32
      %35 = vector.broadcast %cst_17 : f32 to vector<4x256xf32>
      %c0_18 = arith.constant 0 : index
      %c0_19 = arith.constant 0 : index
      %36 = vector.load %arg6[%c0_18, %c0_19] : memref<4x256xf32, #tpu.memory_space<vmem>>, vector<4x256xf32>
      tpu.vector_store %arg6[%c0_18, %c0_19], %35 {strides = array<i32>} : memref<4x256xf32, #tpu.memory_space<vmem>>, vector<4x256xf32>,
      %cst_20 = arith.constant 0.000000e+00 : f32
      %37 = vector.broadcast %cst_20 : f32 to vector<4x256xf32>
      %c0_21 = arith.constant 0 : index
      %c0_22 = arith.constant 0 : index
      %38 = vector.load %arg7[%c0_21, %c0_22] : memref<4x256xf32, #tpu.memory_space<vmem>>, vector<4x256xf32>
      tpu.vector_store %arg7[%c0_21, %c0_22], %37 {strides = array<i32>} : memref<4x256xf32, #tpu.memory_space<vmem>>, vector<4x256xf32>,
    } else {
    }
    %c0 = arith.constant 0 : index
    %c0_1 = arith.constant 0 : index
    %c0_2 = arith.constant 0 : index
    %3 = vector.load %arg2[%c0, %c0_1, %c0_2] : memref<1x4x256xf32, #tpu.memory_space<vmem>>, vector<1x4x256xf32>
    %4 = vector.shape_cast %3 : vector<1x4x256xf32> to vector<4x256xf32>
    %c0_3 = arith.constant 0 : index
    %c0_4 = arith.constant 0 : index
    %c0_5 = arith.constant 0 : index
    %5 = vector.load %arg3[%c0_3, %c0_4, %c0_5] : memref<1x1x256xi8, #tpu.memory_space<vmem>>, vector<1x1x256xi8>
    %6 = vector.shape_cast %5 : vector<1x1x256xi8> to vector<1x256xi8>
    %7 = arith.extsi %6 : vector<1x256xi8> to vector<1x256xi32>
    %cst = arith.constant dense<0xFF800000> : vector<256xf32>
    %8 = vector.multi_reduction <maximumf>, %4, %cst [0] : vector<4x256xf32> to vector<256xf32>
    %9 = vector.shape_cast %8 : vector<256xf32> to vector<1x256xf32>
    %10 = vector.broadcast %9 : vector<1x256xf32> to vector<4x256xf32>
    %11 = arith.subf %4, %10 : vector<4x256xf32>
    %12 = math.exp %11 : vector<4x256xf32>
    %cst_6 = arith.constant dense<0.000000e+00> : vector<256xf32>
    %13 = vector.multi_reduction <add>, %12, %cst_6 [0] : vector<4x256xf32> to vector<256xf32>
    %14 = vector.shape_cast %13 : vector<256xf32> to vector<1x256xf32>
    %15 = tpu.reciprocal %14 : vector<1x256xf32> -> vector<1x256xf32>
    %16 = vector.broadcast %15 : vector<1x256xf32> to vector<4x256xf32>
    %17 = arith.mulf %12, %16 : vector<4x256xf32>
    %18 = tpu.iota {dimensions = array<i32: 0>} : vector<4x256xi32>
    %19 = vector.broadcast %7 : vector<1x256xi32> to vector<4x256xi32>
    %20 = arith.cmpi eq, %18, %19 : vector<4x256xi32>
    %21 = arith.extui %20 : vector<4x256xi1> to vector<4x256xi32>
    %22 = arith.sitofp %21 : vector<4x256xi32> to vector<4x256xf32>
    %c0_7 = arith.constant 0 : index
    %c0_8 = arith.constant 0 : index
    %23 = vector.load %arg6[%c0_7, %c0_8] : memref<4x256xf32, #tpu.memory_space<vmem>>, vector<4x256xf32>
    %24 = arith.mulf %17, %22 : vector<4x256xf32>
    %25 = arith.addf %23, %24 : vector<4x256xf32>
    %c0_9 = arith.constant 0 : index
    %c0_10 = arith.constant 0 : index
    %26 = vector.load %arg6[%c0_9, %c0_10] : memref<4x256xf32, #tpu.memory_space<vmem>>, vector<4x256xf32>
    tpu.vector_store %arg6[%c0_9, %c0_10], %25 {strides = array<i32>} : memref<4x256xf32, #tpu.memory_space<vmem>>, vector<4x256xf32>,
    %c0_11 = arith.constant 0 : index
    %c0_12 = arith.constant 0 : index
    %27 = vector.load %arg7[%c0_11, %c0_12] : memref<4x256xf32, #tpu.memory_space<vmem>>, vector<4x256xf32>
    %28 = arith.mulf %17, %17 : vector<4x256xf32>
    %29 = arith.addf %28, %22 : vector<4x256xf32>
    %30 = arith.addf %27, %29 : vector<4x256xf32>
    %c0_13 = arith.constant 0 : index
    %c0_14 = arith.constant 0 : index
    %31 = vector.load %arg7[%c0_13, %c0_14] : memref<4x256xf32, #tpu.memory_space<vmem>>, vector<4x256xf32>
    tpu.vector_store %arg7[%c0_13, %c0_14], %30 {strides = array<i32>} : memref<4x256xf32, #tpu.memory_space<vmem>>, vector<4x256xf32>,
    %c0_i32_15 = arith.constant 0 : i32
    %32 = arith.cmpi eq, %arg1, %c0_i32_15 : i32
    %33 = arith.extui %32 : i1 to i32
    %c0_i32_16 = arith.constant 0 : i32
    %34 = arith.cmpi ne, %33, %c0_i32_16 : i32
    scf.if %34 {
      %c0_17 = arith.constant 0 : index
      %c0_18 = arith.constant 0 : index
      %35 = vector.load %arg6[%c0_17, %c0_18] : memref<4x256xf32, #tpu.memory_space<vmem>>, vector<4x256xf32>
      %cst_19 = arith.constant dense<0.000000e+00> : vector<4xf32>
      %36 = vector.multi_reduction <add>, %35, %cst_19 [1] : vector<4x256xf32> to vector<4xf32>
      %37 = vector.shape_cast %36 : vector<4xf32> to vector<4x1xf32>
      %c0_20 = arith.constant 0 : index
      %c0_21 = arith.constant 0 : index
      %c0_22 = arith.constant 0 : index
      %38 = vector.load %arg4[%c0_20, %c0_21, %c0_22] : memref<1x4x1xf32, #tpu.memory_space<vmem>>, vector<1x4x1xf32>
      %39 = vector.shape_cast %38 : vector<1x4x1xf32> to vector<4x1xf32>
      %40 = vector.shape_cast %37 : vector<4x1xf32> to vector<1x4x1xf32>
      tpu.vector_store %arg4[%c0_20, %c0_21, %c0_22], %40 {strides = array<i32>} : memref<1x4x1xf32, #tpu.memory_space<vmem>>, vector<1x4x1xf32>,
      %c0_23 = arith.constant 0 : index
      %c0_24 = arith.constant 0 : index
      %41 = vector.load %arg7[%c0_23, %c0_24] : memref<4x256xf32, #tpu.memory_space<vmem>>, vector<4x256xf32>
      %cst_25 = arith.constant dense<0.000000e+00> : vector<4xf32>
      %42 = vector.multi_reduction <add>, %41, %cst_25 [1] : vector<4x256xf32> to vector<4xf32>
      %43 = vector.shape_cast %42 : vector<4xf32> to vector<4x1xf32>
      %c0_26 = arith.constant 0 : index
      %c0_27 = arith.constant 0 : index
      %c0_28 = arith.constant 0 : index
      %44 = vector.load %arg5[%c0_26, %c0_27, %c0_28] : memref<1x4x1xf32, #tpu.memory_space<vmem>>, vector<1x4x1xf32>
      %45 = vector.shape_cast %44 : vector<1x4x1xf32> to vector<4x1xf32>
      %46 = vector.shape_cast %43 : vector<4x1xf32> to vector<1x4x1xf32>
      tpu.vector_store %arg5[%c0_26, %c0_27, %c0_28], %46 {strides = array<i32>} : memref<1x4x1xf32, #tpu.memory_space<vmem>>, vector<1x4x1xf32>,
    } else {
    }
    return
  }
  func.func @transform_0(%arg0: i32, %arg1: i32) -> (i32, i32, i32) {
    %c0_i32 = arith.constant 0 : i32
    %c0_i32_0 = arith.constant 0 : i32
    return %arg0, %c0_i32, %arg1 : i32, i32, i32
  }
  func.func @transform_1(%arg0: i32, %arg1: i32) -> (i32, i32, i32) {
    %c0_i32 = arith.constant 0 : i32
    %c0_i32_0 = arith.constant 0 : i32
    return %arg0, %c0_i32, %arg1 : i32, i32, i32
  }
  func.func @transform_2(%arg0: i32, %arg1: i32) -> (i32, i32, i32) {
    %c0_i32 = arith.constant 0 : i32
    %c0_i32_0 = arith.constant 0 : i32
    %c0_i32_1 = arith.constant 0 : i32
    return %arg0, %c0_i32, %c0_i32_0 : i32, i32, i32
  }
  func.func @transform_3(%arg0: i32, %arg1: i32) -> (i32, i32, i32) {
    %c0_i32 = arith.constant 0 : i32
    %c0_i32_0 = arith.constant 0 : i32
    %c0_i32_1 = arith.constant 0 : i32
    return %arg0, %c0_i32, %c0_i32_0 : i32, i32, i32
  }
}

</mosaic_0001>

<llo_original>
// kernel: tpu_custom_call.1
$region0: #{tpu_custom_call.1}
  #allocation0 [shape = 'u32[]', space=smem, size = 0x4, offset = 0x4, fixed_abs, tag = 'smem constant byte address 0x4 - core index']
  #allocation1 [shape = 'u32[72,128]{1,0:T(1,128)}', space=vmem, size = 0x9000, scoped, tag = 'internal scratch']
  #allocation2 [shape = 'f32[4,256]{1,0:T(4,128)}', space=vmem, size = 0x1000, scoped, tag = 'scratch operand']
  #allocation3 [shape = 'f32[4,256]{1,0:T(4,128)}', space=vmem, size = 0x1000, scoped, tag = 'scratch operand']
  %s0 = inlined_call_operand.hbm [shape: f32[2,4,256], index: 0, kind: input, shape index: {}]
  %s1 = inlined_call_operand.vmem [shape: s8[2,1,256], index: 1, kind: input, shape index: {}]
  %s2 = inlined_call_operand.vmem [shape: f32[2,4,1], index: 2, kind: output, shape index: {0}]
  %s3 = inlined_call_operand.vmem [shape: f32[2,4,1], index: 3, kind: output, shape index: {1}]
  %4 = xla_tuple %s2, %s3
  %s5 = sld [smem:[#allocation0]]
  $region61: #{tpu_custom_call.1} parent=0
    _
  %s7 = ssub.s32 1, %s5
  %s8 = scalar_select 0, %s7, %s5
  $region1: #{tpu_custom_call.1} parent=0
    #allocation4 [shape = 'u8[8192]{0}', space=vmem, size = 0x2000, scoped, tag = 'input window, operand 0']
    #allocation5 [shape = 's32[2]{0}', space=sflag, size = 0x8, scoped, tag = 'scoped memory for tpu_custom_call.1']
    %9 = vsyncpa [#allocation5], 0
    %s10 = scalar_lea.sflag [#allocation5], 1
    %11 = vsyncpa %s10, 0
    loop: start=0, step=1, limit=4
    $region2: #{tpu_custom_call.1} parent=1 // loop_pre_header
      _
    $region3: #{tpu_custom_call.1} parent=1 // loop_header
      %s13 = sphi 0, %s17
      %p14 = scmp.ge.s32.totalorder %s13, 4
      %s20 = sphi 0, %s32
      %s21 = sphi 0, %s28
      %s22 = sphi 0, %s20
      %s23 = sphi 0, %s21
      %s24 = sphi 0, %s22
      %s25 = sphi 0, %s23
      %s37 = sphi 0, %s39
      %s40 = sphi 0, %s37
      %s41 = sphi 0, %s40
      %s57 = sphi 0, %s41
      %s65 = sphi 0, %s67
      %s68 = sphi 0, %s65
      %s69 = sphi 0, %s68
      %s85 = sphi 0, %s69
      %s91 = sphi 0, %s93
      %s94 = sphi 0, %s91
      %s95 = sphi 0, %s94
      %s111 = sphi 0, %s95
      %s117 = sphi 0, %s119
      %s120 = sphi 0, %s117
      %s121 = sphi 0, %s120
      %s137 = sphi 0, %s121
    $region4: #{tpu_custom_call.1} parent=1 // loop_header_branch
      %16 = sbr.rel (%p14) target = $region8
    $region5: #{tpu_custom_call.1} parent=1 // loop_body
      %s18 = ssub.s32 %s13, 1
      %s19 = ssub.s32 %s13, 2
      %s26 = sadd.s32 1, %s21
      %p27 = scmp.ge.s32.totalorder %s26, 1
      %s28 = scalar_select %p27, 0, %s26
      %s29 = sadd.s32 1, %s20
      %s30 = scalar_select %p27, %s29, %s20
      %p31 = scmp.ge.s32.totalorder %s30, 2
      %s32 = scalar_select %p31, 0, %s30
      %s33 = ssub.s32 %s20, %s32
      %s34 = ssub.s32 %s21, %s28
      %s35 = sor.u32 %s33, %s34
      %p36 = scmp.eq.s32.totalorder %s35, 0
      %s38 = sadd.s32 %s37, 1
      %s39 = scalar_select %p36, %s37, %s38
      %p42 = pneg %p36
      %p43 = scmp.eq.s32.totalorder %s13, 1
      %p44 = por %p42, %p43
      %p45 = scmp.ne.s32.totalorder %s37, %s40
      %p46 = scmp.eq.s32.totalorder %s13, 0
      %p47 = por %p45, %p46
      %p48 = scmp.ne.s32.totalorder %s37, %s40
      %p49 = scmp.eq.s32.totalorder %s18, 1
      %p50 = por %p48, %p49
      %p51 = scmp.ne.s32.totalorder %s40, %s41
      %p52 = scmp.eq.s32.totalorder %s18, 0
      %p53 = por %p51, %p52
      %p54 = scmp.ne.s32.totalorder %s40, %s41
      %p55 = scmp.eq.s32.totalorder %s19, 1
      %p56 = por %p54, %p55
      %p58 = scmp.ne.s32.totalorder %s41, %s57
      %p59 = scmp.eq.s32.totalorder %s19, 0
      %p60 = por %p58, %p59
      %s61 = ssub.s32 %s20, %s32
      %s62 = ssub.s32 %s21, %s28
      %s63 = sor.u32 %s61, %s62
      %p64 = scmp.eq.s32.totalorder %s63, 0
      %s66 = sadd.s32 %s65, 1
      %s67 = scalar_select %p64, %s65, %s66
      %p70 = pneg %p64
      %p71 = scmp.eq.s32.totalorder %s13, 1
      %p72 = por %p70, %p71
      %p73 = scmp.ne.s32.totalorder %s65, %s68
      %p74 = scmp.eq.s32.totalorder %s13, 0
      %p75 = por %p73, %p74
      %p76 = scmp.ne.s32.totalorder %s65, %s68
      %p77 = scmp.eq.s32.totalorder %s18, 1
      %p78 = por %p76, %p77
      %p79 = scmp.ne.s32.totalorder %s68, %s69
      %p80 = scmp.eq.s32.totalorder %s18, 0
      %p81 = por %p79, %p80
      %p82 = scmp.ne.s32.totalorder %s68, %s69
      %p83 = scmp.eq.s32.totalorder %s19, 1
      %p84 = por %p82, %p83
      %p86 = scmp.ne.s32.totalorder %s69, %s85
      %p87 = scmp.eq.s32.totalorder %s19, 0
      %p88 = por %p86, %p87
      %s89 = ssub.s32 %s20, %s32
      %p90 = scmp.eq.s32.totalorder %s89, 0
      %s92 = sadd.s32 %s91, 1
      %s93 = scalar_select %p90, %s91, %s92
      %p96 = pneg %p90
      %p97 = scmp.eq.s32.totalorder %s13, 1
      %p98 = por %p96, %p97
      %p99 = scmp.ne.s32.totalorder %s91, %s94
      %p100 = scmp.eq.s32.totalorder %s13, 0
      %p101 = por %p99, %p100
      %p102 = scmp.ne.s32.totalorder %s91, %s94
      %p103 = scmp.eq.s32.totalorder %s18, 1
      %p104 = por %p102, %p103
      %p105 = scmp.ne.s32.totalorder %s94, %s95
      %p106 = scmp.eq.s32.totalorder %s18, 0
      %p107 = por %p105, %p106
      %p108 = scmp.ne.s32.totalorder %s94, %s95
      %p109 = scmp.eq.s32.totalorder %s19, 1
      %p110 = por %p108, %p109
      %p112 = scmp.ne.s32.totalorder %s95, %s111
      %p113 = scmp.eq.s32.totalorder %s19, 0
      %p114 = por %p112, %p113
      %s115 = ssub.s32 %s20, %s32
      %p116 = scmp.eq.s32.totalorder %s115, 0
      %s118 = sadd.s32 %s117, 1
      %s119 = scalar_select %p116, %s117, %s118
      %p122 = pneg %p116
      %p123 = scmp.eq.s32.totalorder %s13, 1
      %p124 = por %p122, %p123
      %p125 = scmp.ne.s32.totalorder %s117, %s120
      %p126 = scmp.eq.s32.totalorder %s13, 0
      %p127 = por %p125, %p126
      %p128 = scmp.ne.s32.totalorder %s117, %s120
      %p129 = scmp.eq.s32.totalorder %s18, 1
      %p130 = por %p128, %p129
      %p131 = scmp.ne.s32.totalorder %s120, %s121
      %p132 = scmp.eq.s32.totalorder %s18, 0
      %p133 = por %p131, %p132
      %p134 = scmp.ne.s32.totalorder %s120, %s121
      %p135 = scmp.eq.s32.totalorder %s19, 1
      %p136 = por %p134, %p135
      %p138 = scmp.ne.s32.totalorder %s121, %s137
      %p139 = scmp.eq.s32.totalorder %s19, 0
      %p140 = por %p138, %p139
      %p141 = scmp.le.s32.totalorder 1, %s13
      %p142 = scmp.lt.s32.totalorder %s13, 3
      %p143 = pnand %p141, %p142
      %p144 = pneg %p143
      // Predicated region
      $region9: #{tpu_custom_call.1} parent=5 // pred_check
        _
      $region10: #{tpu_custom_call.1} parent=5 // pred_check_branch
        %146 = sbr.rel (%p143) target = $region12
      $region11: #{tpu_custom_call.1} parent=5 // pred_region
        %s147 = ssub.s32 %s13, 1
      $region12: #{tpu_custom_call.1} parent=5 // pred_fallthru
        _
      %p148 = scmp.lt.s32.totalorder %s13, 2
      // Predicated region
      $region13: #{tpu_custom_call.1} parent=5 // pred_check
        %p149 = pneg %p148
      $region14: #{tpu_custom_call.1} parent=5 // pred_check_branch
        %151 = sbr.rel (%p149) target = $region16
      $region15: #{tpu_custom_call.1} parent=5 // pred_region
        // Predicated region
        $region17: #{tpu_custom_call.1} parent=15 // pred_check
          %p152 = pneg %p47
        $region18: #{tpu_custom_call.1} parent=15 // pred_check_branch
          %154 = sbr.rel (%p152) target = $region20
        $region19: #{tpu_custom_call.1} parent=15 // pred_region
          %s155 = sand.u32 %s37, 1
          %s156 = scalar_lea.sflag [#allocation5], %s155
          %s157 = sand.u32 %s37, 1
          %s158 = smul.addr %s157, 8
          %s159 = scalar_lea.vmem [#allocation4], %s158
          %s160 = smul.u32 2, %s21
          %162 = vsyncadd %s156, 0
          %s163 = smul.addr %s20, 2
          %s164 = sadd.s32 %s160, %s163
          %s165 = smul.addr %s164, 4
          %s166 = scalar_lea.hbm %s0, %s165
          %s168 = sshll.u32 %s166, 4
          %s169 = int_to_ptr.hbm [resolvable:$true] %s168
          %s170 = sshll.u32 %s159, 4
          %s171 = int_to_ptr.vmem [resolvable:$true] %s170
          %173 = dma.hbm_to_vmem [thread:$0]  %s169, 128, %s171, %s156
        $region20: #{tpu_custom_call.1} parent=15 // pred_fallthru
          _
        // Predicated region
        $region21: #{tpu_custom_call.1} parent=15 // pred_check
          %p174 = pneg %p75
        $region22: #{tpu_custom_call.1} parent=15 // pred_check_branch
          %176 = sbr.rel (%p174) target = $region24
        $region23: #{tpu_custom_call.1} parent=15 // pred_region
          %s177 = smul.u32 2, %s21
          %p178 = scmp.lt.s32.totalorder %s20, 1
          %s179 = scalar_select %p178, %s20, 1
          %p180 = scmp.lt.s32.totalorder %s177, 1
          %s181 = scalar_select %p180, %s177, 1
          %s182 = smul.addr %s179, 2
          %s183 = sadd.s32 %s181, %s182
          %s184 = scalar_lea.vmem %s1, %s183
          %s185 = smul.u32 2, %s21
        $region24: #{tpu_custom_call.1} parent=15 // pred_fallthru
          _
      $region16: #{tpu_custom_call.1} parent=5 // pred_fallthru
        _
      %p186 = scmp.le.s32.totalorder 1, %s13
      %p187 = scmp.lt.s32.totalorder %s13, 3
      %p188 = pnand %p186, %p187
      %p189 = pneg %p188
      // Predicated region
      $region25: #{tpu_custom_call.1} parent=5 // pred_check
        _
      $region26: #{tpu_custom_call.1} parent=5 // pred_check_branch
        %191 = sbr.rel (%p188) target = $region28
      $region27: #{tpu_custom_call.1} parent=5 // pred_region
        %s192 = ssub.s32 %s13, 1
        %s193 = sand.u32 %s40, 1
        %s194 = scalar_lea.sflag [#allocation5], %s193
        %s195 = sand.u32 %s40, 1
        %s196 = smul.addr %s195, 8
        %s197 = scalar_lea.vmem [#allocation4], %s196
        // Predicated region
        $region29: #{tpu_custom_call.1} parent=27 // pred_check
          %p198 = pneg %p53
        $region30: #{tpu_custom_call.1} parent=27 // pred_check_branch
          %200 = sbr.rel (%p198) target = $region32
        $region31: #{tpu_custom_call.1} parent=27 // pred_region
          %202 = dma.done %s194, 128
        $region32: #{tpu_custom_call.1} parent=27 // pred_fallthru
          _
        %s203 = sand.u32 %s40, 1
        %s204 = scalar_lea.sflag [#allocation5], %s203
        %s205 = sand.u32 %s40, 1
        %s206 = smul.addr %s205, 8
        %s207 = scalar_lea.vmem [#allocation4], %s206
        %p208 = pneg %p53
        %p209 = pneg %p50
        %s210 = smul.u32 2, %s23
        %p211 = scmp.lt.s32.totalorder %s22, 1
        %s212 = scalar_select %p211, %s22, 1
        %p213 = scmp.lt.s32.totalorder %s210, 1
        %s214 = scalar_select %p213, %s210, 1
        %s215 = smul.addr %s212, 2
        %s216 = sadd.s32 %s214, %s215
        %s217 = scalar_lea.vmem %s1, %s216
        %p218 = pneg %p81
        %p219 = pneg %p78
        %p220 = pneg %p107
        %p221 = pneg %p104
        %p222 = scmp.lt.s32.totalorder %s22, 1
        %s223 = scalar_select %p222, %s22, 1
        %s224 = smul.addr %s223, 4
        %s225 = scalar_lea.vmem %s2, %s224
        %p226 = pneg %p133
        %p227 = pneg %p130
        %p228 = scmp.lt.s32.totalorder %s22, 1
        %s229 = scalar_select %p228, %s22, 1
        %s230 = smul.addr %s229, 4
        %s231 = scalar_lea.vmem %s3, %s230
        %s232 = smul.u32 2, %s23
        %s233 = smul.u32 2, %s23
        %p234 = scmp.lt.s32.totalorder %s22, 1
        %s235 = scalar_select %p234, %s22, 1
        %p236 = scmp.lt.s32.totalorder %s233, 1
        %s237 = scalar_select %p236, %s233, 1
        %s238 = smul.addr %s235, 2
        %s239 = sadd.s32 %s237, %s238
        %s240 = scalar_lea.vmem %s1, %s239
        %s241 = smul.u32 2, %s23
        %p242 = scmp.lt.s32.totalorder %s22, 1
        %s243 = scalar_select %p242, %s22, 1
        %s244 = smul.addr %s243, 4
        %s245 = scalar_lea.vmem %s2, %s244
        %p246 = scmp.lt.s32.totalorder %s22, 1
        %s247 = scalar_select %p246, %s22, 1
        %s248 = smul.addr %s247, 4
        %s249 = scalar_lea.vmem %s3, %s248
        %p250 = scmp.eq.s32.totalorder %s23, 0
        // Predicated region
        $region33: #{tpu_custom_call.1} parent=27 // pred_check
          %p251 = pneg %p250
        $region34: #{tpu_custom_call.1} parent=27 // pred_check_branch
          %253 = sbr.rel (%p251) target = $region36
        $region35: #{tpu_custom_call.1} parent=27 // pred_region
          %254 = vst [vmem:[#allocation2] sm:$0xff] 0.0
          %255 = vst [vmem:[#allocation3] sm:$0xff] 0.0
        $region36: #{tpu_custom_call.1} parent=27 // pred_fallthru
          _
        %v256 = vld [vmem:[%s197] sm:$0xff]
        %v257 = vld [vmem:[%s240] sm:$0x3]
        %v258 = vunpack.c.0.s8 %v257
        %260 = vst [vmem:[#allocation1] ss:$2 sm:$0xff] %v256
        %v261 = vld.sshfl [vmem:[#allocation1] sm:$0xff pattern:$0x75316420]
        %v262 = vld.sshfl [vmem:[#allocation1 + $0x8] sm:$0xff pattern:$0x75316420]
        %vm265 = vcmask 1043456
        %v266 = vsel %vm265, %v261, -inf
        %v267 = vrot.slane %v266, 4
        %v268 = vmax.f32 %v266, %v267
        %v269 = vrot.slane %v268, 2
        %v270 = vmax.f32 %v268, %v269
        %v271 = vrot.slane %v270, 1
        %v272 = vmax.f32 %v270, %v271
        %v273 = vsel %vm265, %v262, -inf
        %v274 = vrot.slane %v273, 4
        %v275 = vmax.f32 %v273, %v274
        %v276 = vrot.slane %v275, 2
        %v277 = vmax.f32 %v275, %v276
        %v278 = vrot.slane %v277, 1
        %v279 = vmax.f32 %v277, %v278
        %v282 = vrot.slane %v279, 4
        %v283 = vsel %vm265, %v272, %v282
        %v285 = vsub.f32 %v256, %v283
        %v286 = vmul.f32 %v285, 1.442695
        %v287 = vpow.pop %v286
        %289 = vst [vmem:[#allocation1] ss:$2 sm:$0xff] %v287
        %v290 = vld.sshfl [vmem:[#allocation1] sm:$0xff pattern:$0x75316420]
        %v291 = vld.sshfl [vmem:[#allocation1 + $0x8] sm:$0xff pattern:$0x75316420]
        %v294 = vsel %vm265, %v290, 0.0
        %v295 = vrot.slane %v294, 4
        %v296 = vadd.f32 %v294, %v295
        %v297 = vrot.slane %v296, 2
        %v298 = vadd.f32 %v296, %v297
        %v299 = vrot.slane %v298, 1
        %v300 = vadd.f32 %v298, %v299
        %v301 = vsel %vm265, %v291, 0.0
        %v302 = vrot.slane %v301, 4
        %v303 = vadd.f32 %v301, %v302
        %v304 = vrot.slane %v303, 2
        %v305 = vadd.f32 %v303, %v304
        %v306 = vrot.slane %v305, 1
        %v307 = vadd.f32 %v305, %v306
        %v308 = vrcp.pop %v300
        %v309 = vmul.f32 %v300, %v308
        %v310 = vsub.f32 1.0, %v309
        %v311 = vmul.f32 %v308, %v310
        %v312 = vadd.f32 %v308, %v311
        %vm313 = vweird.f32 %v300
        %vm314 = vweird.f32 %v308
        %vm315 = vmor %vm313, %vm314
        %v316 = vsel %vm315, %v308, %v312
        %v317 = vand.u32 2147483647, %v300
        %vm318 = vcmp.eq.f32.partialorder %v317, 8.507059e+37
        %v319 = vand.u32 %v300, 2147483648
        %v320 = vor.u32 1.1754944e-38, %v319
        %v321 = vsel %vm318, %v320, %v316
        %v322 = vrcp.pop %v307
        %v323 = vmul.f32 %v307, %v322
        %v324 = vsub.f32 1.0, %v323
        %v325 = vmul.f32 %v322, %v324
        %v326 = vadd.f32 %v322, %v325
        %vm327 = vweird.f32 %v307
        %vm328 = vweird.f32 %v322
        %vm329 = vmor %vm327, %vm328
        %v330 = vsel %vm329, %v322, %v326
        %v331 = vand.u32 2147483647, %v307
        %vm332 = vcmp.eq.f32.partialorder %v331, 8.507059e+37
        %v333 = vand.u32 %v307, 2147483648
        %v334 = vor.u32 1.1754944e-38, %v333
        %v335 = vsel %vm332, %v334, %v330
        %v338 = vrot.slane %v335, 4
        %v339 = vsel %vm265, %v321, %v338
        %v341 = vmul.f32 %v287, %v339
        %v342 = vlaneseq
        %v343 = vshrl.u32 %v342, 7
        %v344 = vperm.slane %v258, 0
        %v345 = vperm.slane %v258, 4
        %v346 = vperm.slane %v344, 0
        %v347 = vperm.slane %v345, 0
        %vm348 = vcmp.eq.s32.totalorder %v343, %v346
        %vm349 = vcmp.eq.s32.totalorder %v343, %v347
        %v350 = vsel %vm348, 1, 0
        %v351 = vsel %vm349, 1, 0
        %v352 = vcvt.s32.f32 %v350
        %v353 = vcvt.s32.f32 %v351
        %v354 = vld [vmem:[#allocation2] sm:$0xff]
        %v357 = vrot.slane %v353, 4
        %v358 = vsel %vm265, %v352, %v357
        %v360 = vmul.f32 %v341, %v358
        %v361 = vadd.f32 %v354, %v360
        %362 = vst [vmem:[#allocation2] sm:$0xff] %v361
        %v363 = vld [vmem:[#allocation3] sm:$0xff]
        %v364 = vmul.f32 %v341, %v341
        %v365 = vadd.f32 %v364, %v358
        %v366 = vadd.f32 %v363, %v365
        %367 = vst [vmem:[#allocation3] sm:$0xff] %v366
        // Predicated region
        $region37: #{tpu_custom_call.1} parent=27 // pred_check
          %p368 = pneg %p250
        $region38: #{tpu_custom_call.1} parent=27 // pred_check_branch
          %370 = sbr.rel (%p368) target = $region40
        $region39: #{tpu_custom_call.1} parent=27 // pred_region
          %v371 = vld [vmem:[#allocation2] sm:$0xff]
          %373 = vst [vmem:[#allocation1] ss:$2 sm:$0xff] %v371
          %v374 = vld.sshfl [vmem:[#allocation1] sm:$0xff pattern:$0x75316420]
          %v375 = vld.sshfl [vmem:[#allocation1 + $0x8] sm:$0xff pattern:$0x75316420]
          %v378 = vsel %vm265, %v374, 0.0
          %v379 = vsel %vm265, %v375, 0.0
          %v380 = vadd.f32 %v378, %v379
          %381 = vadd.xlane.f32.xlu0 %v380
          %v382 = vpop.xlane.xlu0 %381
          %vm383 = vcmask 3072
          %384 = vst.msk [vmem:[%s245] sm:$0xf] %vm383, %v382
          %v385 = vld [vmem:[#allocation3] sm:$0xff]
          %387 = vst [vmem:[#allocation1] ss:$2 sm:$0xff] %v385
          %v388 = vld.sshfl [vmem:[#allocation1] sm:$0xff pattern:$0x75316420]
          %v389 = vld.sshfl [vmem:[#allocation1 + $0x8] sm:$0xff pattern:$0x75316420]
          %v392 = vsel %vm265, %v388, 0.0
          %v393 = vsel %vm265, %v389, 0.0
          %v394 = vadd.f32 %v392, %v393
          %395 = vadd.xlane.f32.xlu0 %v394
          %v396 = vpop.xlane.xlu0 %395
          %397 = vst.msk [vmem:[%s249] sm:$0xf] %vm383, %v396
        $region40: #{tpu_custom_call.1} parent=27 // pred_fallthru
          _
        %p398 = scmp.lt.s32.totalorder %s22, 1
        %s399 = scalar_select %p398, %s22, 1
        %s400 = smul.addr %s399, 4
        %s401 = scalar_lea.vmem %s2, %s400
        %p402 = scmp.lt.s32.totalorder %s22, 1
        %s403 = scalar_select %p402, %s22, 1
        %s404 = smul.addr %s403, 4
        %s405 = scalar_lea.vmem %s3, %s404
        // Predicated region
        $region41: #{tpu_custom_call.1} parent=27 // pred_check
          %p406 = pneg %p104
        $region42: #{tpu_custom_call.1} parent=27 // pred_check_branch
          %408 = sbr.rel (%p406) target = $region44
        $region43: #{tpu_custom_call.1} parent=27 // pred_region
          _
        $region44: #{tpu_custom_call.1} parent=27 // pred_fallthru
          _
        // Predicated region
        $region45: #{tpu_custom_call.1} parent=27 // pred_check
          %p409 = pneg %p130
        $region46: #{tpu_custom_call.1} parent=27 // pred_check_branch
          %411 = sbr.rel (%p409) target = $region48
        $region47: #{tpu_custom_call.1} parent=27 // pred_region
          _
        $region48: #{tpu_custom_call.1} parent=27 // pred_fallthru
          _
      $region28: #{tpu_custom_call.1} parent=5 // pred_fallthru
        _
      %p412 = scmp.le.s32.totalorder 2, %s13
      // Predicated region
      $region49: #{tpu_custom_call.1} parent=5 // pred_check
        %p413 = pneg %p412
      $region50: #{tpu_custom_call.1} parent=5 // pred_check_branch
        %415 = sbr.rel (%p413) target = $region52
      $region51: #{tpu_custom_call.1} parent=5 // pred_region
        %s416 = ssub.s32 %s13, 2
        // Predicated region
        $region53: #{tpu_custom_call.1} parent=51 // pred_check
          %p417 = pneg %p110
        $region54: #{tpu_custom_call.1} parent=51 // pred_check_branch
          %419 = sbr.rel (%p417) target = $region56
        $region55: #{tpu_custom_call.1} parent=51 // pred_region
          %p420 = scmp.lt.s32.totalorder %s24, 1
          %s421 = scalar_select %p420, %s24, 1
          %s422 = smul.addr %s421, 4
          %s423 = scalar_lea.vmem %s2, %s422
        $region56: #{tpu_custom_call.1} parent=51 // pred_fallthru
          _
        // Predicated region
        $region57: #{tpu_custom_call.1} parent=51 // pred_check
          %p424 = pneg %p136
        $region58: #{tpu_custom_call.1} parent=51 // pred_check_branch
          %426 = sbr.rel (%p424) target = $region60
        $region59: #{tpu_custom_call.1} parent=51 // pred_region
          %p427 = scmp.lt.s32.totalorder %s24, 1
          %s428 = scalar_select %p427, %s24, 1
          %s429 = smul.addr %s428, 4
          %s430 = scalar_lea.vmem %s3, %s429
        $region60: #{tpu_custom_call.1} parent=51 // pred_fallthru
          _
      $region52: #{tpu_custom_call.1} parent=5 // pred_fallthru
        _
    $region6: #{tpu_custom_call.1} parent=1 // loop_footer
      %s17 = sadd.s32 1, %s13
    $region7: #{tpu_custom_call.1} parent=1 // loop_footer_branch
      %12 = sbr.rel target = $region3
    $region8: #{tpu_custom_call.1} parent=1 // loop_exit
      _
    %431 = vsyncpa [#allocation5], 1
    %s432 = scalar_lea.sflag [#allocation5], 1
    %433 = vsyncpa %s432, 1

</llo_original>
